<compile_context>
chip_gen: v5e
topology: v5e:2x2
jax: 0.10.0
libtpu: 0.0.40
codegen_flags: <defaults>
</compile_context>

<pallas_src>
import functools
import math

import jax
import jax.numpy as jnp
from jax.experimental import pallas as pl
from jax.experimental.pallas import tpu as pltpu


# --------------------------------------------------------------------------- #
# Hardware query (trace-time, cached).  Falls back to conservative defaults.
# --------------------------------------------------------------------------- #
@functools.lru_cache(maxsize=None)
def _tpu_params():
    kind = ""
    try:
        kind = jax.devices()[0].device_kind.lower()
    except Exception:
        pass
    if "v5" in kind:
        gen = 5
    elif "v6" in kind:
        gen = 6
    elif "v7" in kind:
        gen = 7
    else:
        gen = 0
    vmem = None
    try:
        vmem = int(getattr(pltpu.get_tpu_info(), "vmem_capacity_bytes", 0)) or None
    except Exception:
        vmem = None
    if vmem is None:
        # v5e/v6e: 128 MiB per core; v7x: 64 MiB per TC; unknown: conservative.
        vmem = (128 << 20) if gen in (5, 6) else (64 << 20)
    # (peak bf16 MXU flop/s, HBM bytes/s) per TensorCore — rough roofline numbers.
    peak_bf16, hbm_bw = {
        5: (197e12, 0.82e12),
        6: (918e12, 1.35e12),
        7: (996e12, 3.2e12),
    }.get(gen, (918e12, 1.35e12))
    return gen, vmem, peak_bf16, hbm_bw


def _vmem_budgets():
    _, vmem, _, _ = _tpu_params()
    # v5e/v6e (128 MiB): ~77 MiB limit / ~25 MiB block budget.
    # v7x     (64 MiB):  ~38 MiB limit / ~13 MiB block budget.
    vmem_limit = min(int(vmem * 0.6), 100 << 20)
    block_budget = vmem_limit // 3
    return vmem_limit, block_budget


# --------------------------------------------------------------------------- #
# Interpolation weights (align_corners=True), built once in the JAX wrapper.
# --------------------------------------------------------------------------- #
def _axis_coords(n_in: int, n_out: int):
    """Per output index: (lo index, hi index, frac) for align_corners=True."""
    if n_out == 1 or n_in == 1:
        idx0 = jnp.zeros((n_out,), jnp.int32)
        return idx0, idx0, jnp.zeros((n_out,), jnp.float32)
    src = jnp.arange(n_out, dtype=jnp.float32) * (n_in - 1) / (n_out - 1)
    i0 = jnp.clip(jnp.floor(src).astype(jnp.int32), 0, n_in - 2)
    return i0, i0 + 1, src - i0.astype(jnp.float32)


def _bilinear_matrix(n_in: int, n_out: int) -> jnp.ndarray:
    """Interpolation matrix W (n_out, n_in), align_corners=True, float32."""
    i0, i1, frac = _axis_coords(n_in, n_out)
    oh0 = jax.nn.one_hot(i0, n_in, dtype=jnp.float32)
    oh1 = jax.nn.one_hot(i1, n_in, dtype=jnp.float32)
    return (1.0 - frac)[:, None] * oh0 + frac[:, None] * oh1


def _choose_bc(nc: int, bytes_per_channel: int, budget_bytes: int, align: int) -> int:
    """Channel-block size: `align`-aligned divisor of nc fitting the VMEM budget."""
    cands = [d for d in range(align, nc + 1, align) if nc % d == 0] or [nc]
    cap = max(1, budget_bytes // max(1, bytes_per_channel))
    fitting = [d for d in cands if d <= cap] or [cands[0]]
    bc = max(fitting)
    # Keep >=2 grid steps when possible so both v7x TensorCores get work and the
    # DMA pipeline has something to overlap with.
    if bc >= nc and nc >= 2 * align:
        smaller = [d for d in fitting if d <= nc // 2]
        if smaller:
            bc = max(smaller)
    return bc


# --------------------------------------------------------------------------- #
# Kernels
# --------------------------------------------------------------------------- #
def _kron_kernel(kt_ref, x_ref, o_ref):
    # kt_ref: (Hi*Wi, (Ho*Wo)_pad)   x_ref: (Bc, Hi*Wi)
    # o_ref : (Bc, (Ho*Wo)_pad)      -- lane-dense store
    o_ref[...] = jnp.dot(
        x_ref[...], kt_ref[...], preferred_element_type=jnp.float32
    ).astype(o_ref.dtype)


def _sep_kernel(wh_ref, ww_t_ref, x_ref, o_ref):
    # wh_ref: (Ho, Hi)  ww_t_ref: (Wi, Wo)  x_ref: (Bc, Hi, Wi)
    # o_ref : (Bc * Ho, Wo)  -- per-plane rows, no in-kernel flatten relayout
    bc = x_ref.shape[0]
    h_out = wh_ref.shape[0]
    wh = wh_ref[...]
    ww_t = ww_t_ref[...]
    # Per-plane 2-D MXU matmuls only: avoids a batched dot_general and any
    # minor-dim (lane) transpose.  bc is small on this path by construction.
    # TODO(synk): for W_in << 128, fold g=128//W_in planes into the lane dim via
    # a block-diagonal Ww to recover MXU K-depth and lane density.
    for c in range(bc):
        t = jnp.dot(x_ref[c], ww_t, preferred_element_type=jnp.float32)
        plane = jnp.dot(wh, t.astype(wh.dtype), preferred_element_type=jnp.float32)
        o_ref[c * h_out:(c + 1) * h_out, :] = plane.astype(o_ref.dtype)


# --------------------------------------------------------------------------- #
# Wrapper
# --------------------------------------------------------------------------- #
@functools.partial(jax.jit, static_argnames=("scale_factor", "_force_path"))
def interpolate_bilinear_align_corners(x: jnp.ndarray, scale_factor=2, *,
                                       _force_path=None):
    """Equivalent of Interpolate(scale_factor, 'bilinear').forward; x: NCHW."""
    N, C, H_in, W_in = x.shape
    H_out = int(math.floor(H_in * scale_factor))   # matches PyTorch output size
    W_out = int(math.floor(W_in * scale_factor))
    nc = N * C
    out_dtype = x.dtype
    is_bf16 = x.dtype == jnp.bfloat16
    w_dtype = jnp.bfloat16 if is_bf16 else jnp.float32
    w_item = jnp.dtype(w_dtype).itemsize
    in_item = jnp.dtype(x.dtype).itemsize
    out_item = jnp.dtype(out_dtype).itemsize
    align = 16 if is_bf16 else 8                   # bf16 sublane packing

    _, _, peak_bf16, hbm_bw = _tpu_params()
    vmem_limit, block_budget = _vmem_budgets()
    peak = peak_bf16 if is_bf16 else peak_bf16 / 4.0   # f32 is multi-pass on MXU

    wh = _bilinear_matrix(H_in, H_out)             # (H_out, H_in) f32
    ww = _bilinear_matrix(W_in, W_out)             # (W_out, W_in) f32

    k_in = H_in * W_in
    k_out = H_out * W_out
    k_out_pad = -(-k_out // 128) * 128             # lane-dense output stores

    # --- kron vs separable: per-generation roofline --------------------------
    kron_weight_bytes = k_in * k_out_pad * w_item
    weight_cap = min(4 << 20, block_budget // 4)
    ch_bytes = k_in * in_item + k_out * out_item
    mem_t = ch_bytes / hbm_bw
    kron_compute_t = 2.0 * k_in * k_out_pad / peak
    sep_compute_t = 2.0 * (H_in * W_in * W_out + H_out * H_in * W_out) / peak
    use_kron = (kron_weight_bytes <= weight_cap
                and kron_compute_t <= 1.25 * max(mem_t, sep_compute_t))
    if _force_path == "kron":
        use_kron = True
    elif _force_path == "separable":
        use_kron = False

    compiler_params = pltpu.CompilerParams(
        dimension_semantics=("parallel",),
        vmem_limit_bytes=int(vmem_limit),
    )

    if use_kron:
        # Single MXU matmul per block: out = x_flat @ kron(Wh, Ww)^T (padded cols).
        kron_t = jnp.kron(wh, ww).T.astype(w_dtype)            # (k_in, k_out)
        if k_out_pad != k_out:
            kron_t = jnp.pad(kron_t, ((0, 0), (0, k_out_pad - k_out)))
        x_flat = x.reshape(nc, k_in)
        # Per-channel VMEM: double-buffered in/out blocks + f32 matmul result.
        per_ch = 2 * (k_in * in_item + k_out_pad * out_item) + k_out_pad * 4
        budget = max(per_ch, block_budget - 2 * kron_weight_bytes)
        # TODO(synk): single-buffer the grid-invariant weight spec
        # (pipeline_mode=pl.Buffered(1)) once verified on all generations.
        bc = _choose_bc(nc, per_ch, budget, align)
        cost = pl.CostEstimate(
            flops=2 * nc * k_in * k_out_pad,
            transcendentals=0,
            bytes_accessed=nc * k_in * in_item + nc * k_out_pad * out_item
            + k_in * k_out_pad * w_item,
        )
        out_flat = pl.pallas_call(
            _kron_kernel,
            out_shape=jax.ShapeDtypeStruct((nc, k_out_pad), out_dtype),
            grid=(nc // bc,),
            in_specs=[
                pl.BlockSpec((k_in, k_out_pad), lambda i: (0, 0)),  # resident weight
                pl.BlockSpec((bc, k_in), lambda i: (i, 0)),
            ],
            out_specs=pl.BlockSpec((bc, k_out_pad), lambda i: (i, 0)),
            compiler_params=compiler_params,
            cost_estimate=cost,
        )(kron_t, x_flat)
        if k_out_pad != k_out:
            out_flat = out_flat[:, :k_out]
        return out_flat.reshape(N, C, H_out, W_out)

    # Separable path (large planes / kron compute-bound).
    # TODO(synk): add spatial (H-strip) tiling for planes that exceed VMEM.
    wh_c = wh.astype(w_dtype)                      # (H_out, H_in)
    ww_t = ww.T.astype(w_dtype)                    # (W_in, W_out), pre-transposed
    x3 = x.reshape(nc, H_in, W_in)
    # Per-channel VMEM: double-buffered in/out blocks + f32 temporaries (t, plane).
    per_ch = 2 * (k_in * in_item + k_out * out_item) + (H_in + H_out) * W_out * 4
    sep_weight_bytes = (H_out * H_in + W_in * W_out) * w_item
    budget = max(per_ch, block_budget - 2 * sep_weight_bytes)
    bc = _choose_bc(nc, per_ch, budget, align)
    cost = pl.CostEstimate(
        flops=2 * nc * (H_in * W_in * W_out + H_out * H_in * W_out),
        transcendentals=0,
        bytes_accessed=nc * k_in * in_item + nc * k_out * out_item
        + sep_weight_bytes,
    )
    out2d = pl.pallas_call(
        _sep_kernel,
        out_shape=jax.ShapeDtypeStruct((nc * H_out, W_out), out_dtype),
        grid=(nc // bc,),
        in_specs=[
            pl.BlockSpec((H_out, H_in), lambda i: (0, 0)),
            pl.BlockSpec((W_in, W_out), lambda i: (0, 0)),
            pl.BlockSpec((bc, H_in, W_in), lambda i: (i, 0, 0)),
        ],
        out_specs=pl.BlockSpec((bc * H_out, W_out), lambda i: (i, 0)),
        compiler_params=compiler_params,
        cost_estimate=cost,
    )(wh_c, ww_t, x3)
    return out2d.reshape(N, C, H_out, W_out)


# --------------------------------------------------------------------------- #
# Pure-JAX reference (gather + lerp, same semantics as F.interpolate bilinear
# with align_corners=True) for correctness checking.
# --------------------------------------------------------------------------- #
def _reference(x, scale_factor=2):
    xf = x.astype(jnp.float32)
    N, C, H, W = x.shape
    Ho, Wo = int(math.floor(H * scale_factor)), int(math.floor(W * scale_factor))
    h0, h1, fh = _axis_coords(H, Ho)
    w0, w1, fw = _axis_coords(W, Wo)
    top = xf[:, :, h0, :] * (1.0 - fh)[:, None] + xf[:, :, h1, :] * fh[:, None]
    out = top[:, :, :, w0] * (1.0 - fw) + top[:, :, :, w1] * fw
    return out.astype(x.dtype)


if __name__ == "__main__":
    key = jax.random.PRNGKey(0)
    x = jax.random.normal(key, (2, 4, 16, 16), dtype=jnp.float32)

    ref = _reference(x, scale_factor=2)

    # Default (roofline-selected) path.
    out = jax.block_until_ready(interpolate_bilinear_align_corners(x, scale_factor=2))
    assert out.shape == (2, 4, 32, 32), out.shape
    err = float(jnp.max(jnp.abs(out.astype(jnp.float32) - ref.astype(jnp.float32))))
    assert jnp.allclose(out, ref, atol=1e-4, rtol=1e-4), err

    # Exercise both code paths explicitly (small shapes, cheap).
    for path in ("kron", "separable"):
        outp = jax.block_until_ready(
            interpolate_bilinear_align_corners(x, scale_factor=2, _force_path=path))
        errp = float(jnp.max(jnp.abs(outp.astype(jnp.float32) - ref.astype(jnp.float32))))
        assert jnp.allclose(outp, ref, atol=1e-4, rtol=1e-4), (path, errp)

    print("KERNEL_OK")
</pallas_src>

<mosaic_0001>
module attributes {stable_mosaic.version = 11 : i64} {
  func.func @_kron_kernel(%arg0: i32, %arg1: memref<256x1024xf32, #tpu.memory_space<vmem>>, %arg2: memref<8x256xf32, #tpu.memory_space<vmem>>, %arg3: memref<8x1024xf32, #tpu.memory_space<vmem>>) attributes {dimension_semantics = [#tpu.dimension_semantics<parallel>], iteration_bounds = array<i64: 1>, scalar_prefetch = 0 : i64, scratch_operands = 0 : i64, tpu.core_type = #tpu.core_type<tc>, window_params = [{pipeline_mode = #tpu.pipeline_mode<synchronous>, transform_indices = @transform_0, window_bounds = array<i64: 256, 1024>}, {transform_indices = @transform_1, window_bounds = array<i64: 8, 256>}, {transform_indices = @transform_2, window_bounds = array<i64: 8, 1024>}]} {
    %c0 = arith.constant 0 : index
    %c0_0 = arith.constant 0 : index
    %0 = vector.load %arg2[%c0, %c0_0] : memref<8x256xf32, #tpu.memory_space<vmem>>, vector<8x256xf32>
    %c0_1 = arith.constant 0 : index
    %c0_2 = arith.constant 0 : index
    %1 = vector.load %arg1[%c0_1, %c0_2] : memref<256x1024xf32, #tpu.memory_space<vmem>>, vector<256x1024xf32>
    %cst = arith.constant dense<0.000000e+00> : vector<8x1024xf32>
    %2 = tpu.matmul %0, %1, %cst {dimension_numbers = #tpu.dot_dimension_numbers<[1], [0], [0], [1], [0, 0, 1, 1], [], []>} : vector<8x256xf32>, vector<256x1024xf32>, vector<8x1024xf32> -> vector<8x1024xf32>
    %c0_3 = arith.constant 0 : index
    %c0_4 = arith.constant 0 : index
    %3 = vector.load %arg3[%c0_3, %c0_4] : memref<8x1024xf32, #tpu.memory_space<vmem>>, vector<8x1024xf32>
    tpu.vector_store %arg3[%c0_3, %c0_4], %2 {strides = array<i32>} : memref<8x1024xf32, #tpu.memory_space<vmem>>, vector<8x1024xf32>,
    return
  }
  func.func @transform_0(%arg0: i32) -> (i32, i32) {
    %c0_i32 = arith.constant 0 : i32
    %c0_i32_0 = arith.constant 0 : i32
    %c0_i32_1 = arith.constant 0 : i32
    return %c0_i32, %c0_i32_0 : i32, i32
  }
  func.func @transform_1(%arg0: i32) -> (i32, i32) {
    %c0_i32 = arith.constant 0 : i32
    %c0_i32_0 = arith.constant 0 : i32
    return %arg0, %c0_i32 : i32, i32
  }
  func.func @transform_2(%arg0: i32) -> (i32, i32) {
    %c0_i32 = arith.constant 0 : i32
    %c0_i32_0 = arith.constant 0 : i32
    return %arg0, %c0_i32 : i32, i32
  }
}

</mosaic_0001>

<llo_original>
// kernel: interpolate_bilinear_align_corners.1
$region0: #{interpolate_bilinear_align_corners.1}
  #allocation0 [shape = 'u32[]', space=smem, size = 0x4, offset = 0x4, fixed_abs, tag = 'smem constant byte address 0x4 - core index']
  #allocation1 [shape = 'u32[72,128]{1,0:T(1,128)}', space=vmem, size = 0x9000, scoped, tag = 'internal scratch']
  %s0 = inlined_call_operand.vmem [shape: f32[256,1024], index: 0, kind: input, shape index: {}]
  %s1 = inlined_call_operand.vmem [shape: f32[8,256], index: 1, kind: input, shape index: {}]
  %s2 = inlined_call_operand.vmem [shape: f32[8,1024], index: 2, kind: output, shape index: {}]
  %s3 = sld [smem:[#allocation0]]
  $region18: #{interpolate_bilinear_align_corners.1} parent=0
    _
  %s5 = ssub.s32 1, %s3
  %s6 = scalar_select 0, %s5, %s3
  // Predicated region
  $region2: #{interpolate_bilinear_align_corners.1} parent=0 // pred_check
    _
  $region3: #{interpolate_bilinear_align_corners.1} parent=0 // pred_check_branch
    %8 = sbr.rel (0) target = $region5
  $region4: #{interpolate_bilinear_align_corners.1} parent=0 // pred_region
    _
  $region5: #{interpolate_bilinear_align_corners.1} parent=0 // pred_fallthru
    _
  // Predicated region
  $region6: #{interpolate_bilinear_align_corners.1} parent=0 // pred_check
    _
  $region7: #{interpolate_bilinear_align_corners.1} parent=0 // pred_check_branch
    %10 = sbr.rel (0) target = $region9
  $region8: #{interpolate_bilinear_align_corners.1} parent=0 // pred_region
    _
  $region9: #{interpolate_bilinear_align_corners.1} parent=0 // pred_fallthru
    _
  %v11 = vld [vmem:[%s1] sm:$0xff]
  %v12 = vld [vmem:[%s1 + $0x8] sm:$0xff]
  %v13 = vld [vmem:[%s0] sm:$0xff]
  %v14 = vld [vmem:[%s0 + $0x8] sm:$0xff]
  %v15 = vld [vmem:[%s0 + $0x10] sm:$0xff]
  %v16 = vld [vmem:[%s0 + $0x18] sm:$0xff]
  %v17 = vld [vmem:[%s0 + $0x20] sm:$0xff]
  %v18 = vld [vmem:[%s0 + $0x28] sm:$0xff]
  %v19 = vld [vmem:[%s0 + $0x30] sm:$0xff]
  %v20 = vld [vmem:[%s0 + $0x38] sm:$0xff]
  %v21 = vld [vmem:[%s0 + $0x40] sm:$0xff]
  %v22 = vld [vmem:[%s0 + $0x48] sm:$0xff]
  %v23 = vld [vmem:[%s0 + $0x50] sm:$0xff]
  %v24 = vld [vmem:[%s0 + $0x58] sm:$0xff]
  %v25 = vld [vmem:[%s0 + $0x60] sm:$0xff]
  %v26 = vld [vmem:[%s0 + $0x68] sm:$0xff]
  %v27 = vld [vmem:[%s0 + $0x70] sm:$0xff]
  %v28 = vld [vmem:[%s0 + $0x78] sm:$0xff]
  %v29 = vld [vmem:[%s0 + $0x80] sm:$0xff]
  %v30 = vld [vmem:[%s0 + $0x88] sm:$0xff]
  %v31 = vld [vmem:[%s0 + $0x90] sm:$0xff]
  %v32 = vld [vmem:[%s0 + $0x98] sm:$0xff]
  %v33 = vld [vmem:[%s0 + $0xa0] sm:$0xff]
  %v34 = vld [vmem:[%s0 + $0xa8] sm:$0xff]
  %v35 = vld [vmem:[%s0 + $0xb0] sm:$0xff]
  %v36 = vld [vmem:[%s0 + $0xb8] sm:$0xff]
  %v37 = vld [vmem:[%s0 + $0xc0] sm:$0xff]
  %v38 = vld [vmem:[%s0 + $0xc8] sm:$0xff]
  %v39 = vld [vmem:[%s0 + $0xd0] sm:$0xff]
  %v40 = vld [vmem:[%s0 + $0xd8] sm:$0xff]
  %v41 = vld [vmem:[%s0 + $0xe0] sm:$0xff]
  %v42 = vld [vmem:[%s0 + $0xe8] sm:$0xff]
  %v43 = vld [vmem:[%s0 + $0xf0] sm:$0xff]
  %v44 = vld [vmem:[%s0 + $0xf8] sm:$0xff]
  %v45 = vld [vmem:[%s0 + $0x100] sm:$0xff]
  %v46 = vld [vmem:[%s0 + $0x108] sm:$0xff]
  %v47 = vld [vmem:[%s0 + $0x110] sm:$0xff]
  %v48 = vld [vmem:[%s0 + $0x118] sm:$0xff]
  %v49 = vld [vmem:[%s0 + $0x120] sm:$0xff]
  %v50 = vld [vmem:[%s0 + $0x128] sm:$0xff]
  %v51 = vld [vmem:[%s0 + $0x130] sm:$0xff]
  %v52 = vld [vmem:[%s0 + $0x138] sm:$0xff]
  %v53 = vld [vmem:[%s0 + $0x140] sm:$0xff]
  %v54 = vld [vmem:[%s0 + $0x148] sm:$0xff]
  %v55 = vld [vmem:[%s0 + $0x150] sm:$0xff]
  %v56 = vld [vmem:[%s0 + $0x158] sm:$0xff]
  %v57 = vld [vmem:[%s0 + $0x160] sm:$0xff]
  %v58 = vld [vmem:[%s0 + $0x168] sm:$0xff]
  %v59 = vld [vmem:[%s0 + $0x170] sm:$0xff]
  %v60 = vld [vmem:[%s0 + $0x178] sm:$0xff]
  %v61 = vld [vmem:[%s0 + $0x180] sm:$0xff]
  %v62 = vld [vmem:[%s0 + $0x188] sm:$0xff]
  %v63 = vld [vmem:[%s0 + $0x190] sm:$0xff]
  %v64 = vld [vmem:[%s0 + $0x198] sm:$0xff]
  %v65 = vld [vmem:[%s0 + $0x1a0] sm:$0xff]
  %v66 = vld [vmem:[%s0 + $0x1a8] sm:$0xff]
  %v67 = vld [vmem:[%s0 + $0x1b0] sm:$0xff]
  %v68 = vld [vmem:[%s0 + $0x1b8] sm:$0xff]
  %v69 = vld [vmem:[%s0 + $0x1c0] sm:$0xff]
  %v70 = vld [vmem:[%s0 + $0x1c8] sm:$0xff]
  %v71 = vld [vmem:[%s0 + $0x1d0] sm:$0xff]
  %v72 = vld [vmem:[%s0 + $0x1d8] sm:$0xff]
  %v73 = vld [vmem:[%s0 + $0x1e0] sm:$0xff]
  %v74 = vld [vmem:[%s0 + $0x1e8] sm:$0xff]
  %v75 = vld [vmem:[%s0 + $0x1f0] sm:$0xff]
  %v76 = vld [vmem:[%s0 + $0x1f8] sm:$0xff]
  %v77 = vld [vmem:[%s0 + $0x200] sm:$0xff]
  %v78 = vld [vmem:[%s0 + $0x208] sm:$0xff]
  %v79 = vld [vmem:[%s0 + $0x210] sm:$0xff]
  %v80 = vld [vmem:[%s0 + $0x218] sm:$0xff]
  %v81 = vld [vmem:[%s0 + $0x220] sm:$0xff]
  %v82 = vld [vmem:[%s0 + $0x228] sm:$0xff]
  %v83 = vld [vmem:[%s0 + $0x230] sm:$0xff]
  %v84 = vld [vmem:[%s0 + $0x238] sm:$0xff]
  %v85 = vld [vmem:[%s0 + $0x240] sm:$0xff]
  %v86 = vld [vmem:[%s0 + $0x248] sm:$0xff]
  %v87 = vld [vmem:[%s0 + $0x250] sm:$0xff]
  %v88 = vld [vmem:[%s0 + $0x258] sm:$0xff]
  %v89 = vld [vmem:[%s0 + $0x260] sm:$0xff]
  %v90 = vld [vmem:[%s0 + $0x268] sm:$0xff]
  %v91 = vld [vmem:[%s0 + $0x270] sm:$0xff]
  %v92 = vld [vmem:[%s0 + $0x278] sm:$0xff]
  %v93 = vld [vmem:[%s0 + $0x280] sm:$0xff]
  %v94 = vld [vmem:[%s0 + $0x288] sm:$0xff]
  %v95 = vld [vmem:[%s0 + $0x290] sm:$0xff]
  %v96 = vld [vmem:[%s0 + $0x298] sm:$0xff]
  %v97 = vld [vmem:[%s0 + $0x2a0] sm:$0xff]
  %v98 = vld [vmem:[%s0 + $0x2a8] sm:$0xff]
  %v99 = vld [vmem:[%s0 + $0x2b0] sm:$0xff]
  %v100 = vld [vmem:[%s0 + $0x2b8] sm:$0xff]
  %v101 = vld [vmem:[%s0 + $0x2c0] sm:$0xff]
  %v102 = vld [vmem:[%s0 + $0x2c8] sm:$0xff]
  %v103 = vld [vmem:[%s0 + $0x2d0] sm:$0xff]
  %v104 = vld [vmem:[%s0 + $0x2d8] sm:$0xff]
  %v105 = vld [vmem:[%s0 + $0x2e0] sm:$0xff]
  %v106 = vld [vmem:[%s0 + $0x2e8] sm:$0xff]
  %v107 = vld [vmem:[%s0 + $0x2f0] sm:$0xff]
  %v108 = vld [vmem:[%s0 + $0x2f8] sm:$0xff]
  %v109 = vld [vmem:[%s0 + $0x300] sm:$0xff]
  %v110 = vld [vmem:[%s0 + $0x308] sm:$0xff]
  %v111 = vld [vmem:[%s0 + $0x310] sm:$0xff]
  %v112 = vld [vmem:[%s0 + $0x318] sm:$0xff]
  %v113 = vld [vmem:[%s0 + $0x320] sm:$0xff]
  %v114 = vld [vmem:[%s0 + $0x328] sm:$0xff]
  %v115 = vld [vmem:[%s0 + $0x330] sm:$0xff]
  %v116 = vld [vmem:[%s0 + $0x338] sm:$0xff]
  %v117 = vld [vmem:[%s0 + $0x340] sm:$0xff]
  %v118 = vld [vmem:[%s0 + $0x348] sm:$0xff]
  %v119 = vld [vmem:[%s0 + $0x350] sm:$0xff]
  %v120 = vld [vmem:[%s0 + $0x358] sm:$0xff]
  %v121 = vld [vmem:[%s0 + $0x360] sm:$0xff]
  %v122 = vld [vmem:[%s0 + $0x368] sm:$0xff]
  %v123 = vld [vmem:[%s0 + $0x370] sm:$0xff]
  %v124 = vld [vmem:[%s0 + $0x378] sm:$0xff]
  %v125 = vld [vmem:[%s0 + $0x380] sm:$0xff]
  %v126 = vld [vmem:[%s0 + $0x388] sm:$0xff]
  %v127 = vld [vmem:[%s0 + $0x390] sm:$0xff]
  %v128 = vld [vmem:[%s0 + $0x398] sm:$0xff]
  %v129 = vld [vmem:[%s0 + $0x3a0] sm:$0xff]
  %v130 = vld [vmem:[%s0 + $0x3a8] sm:$0xff]
  %v131 = vld [vmem:[%s0 + $0x3b0] sm:$0xff]
  %v132 = vld [vmem:[%s0 + $0x3b8] sm:$0xff]
  %v133 = vld [vmem:[%s0 + $0x3c0] sm:$0xff]
  %v134 = vld [vmem:[%s0 + $0x3c8] sm:$0xff]
  %v135 = vld [vmem:[%s0 + $0x3d0] sm:$0xff]
  %v136 = vld [vmem:[%s0 + $0x3d8] sm:$0xff]
  %v137 = vld [vmem:[%s0 + $0x3e0] sm:$0xff]
  %v138 = vld [vmem:[%s0 + $0x3e8] sm:$0xff]
  %v139 = vld [vmem:[%s0 + $0x3f0] sm:$0xff]
  %v140 = vld [vmem:[%s0 + $0x3f8] sm:$0xff]
  %v141 = vld [vmem:[%s0 + $0x400] sm:$0xff]
  %v142 = vld [vmem:[%s0 + $0x408] sm:$0xff]
  %v143 = vld [vmem:[%s0 + $0x410] sm:$0xff]
  %v144 = vld [vmem:[%s0 + $0x418] sm:$0xff]
  %v145 = vld [vmem:[%s0 + $0x420] sm:$0xff]
  %v146 = vld [vmem:[%s0 + $0x428] sm:$0xff]
  %v147 = vld [vmem:[%s0 + $0x430] sm:$0xff]
  %v148 = vld [vmem:[%s0 + $0x438] sm:$0xff]
  %v149 = vld [vmem:[%s0 + $0x440] sm:$0xff]
  %v150 = vld [vmem:[%s0 + $0x448] sm:$0xff]
  %v151 = vld [vmem:[%s0 + $0x450] sm:$0xff]
  %v152 = vld [vmem:[%s0 + $0x458] sm:$0xff]
  %v153 = vld [vmem:[%s0 + $0x460] sm:$0xff]
  %v154 = vld [vmem:[%s0 + $0x468] sm:$0xff]
  %v155 = vld [vmem:[%s0 + $0x470] sm:$0xff]
  %v156 = vld [vmem:[%s0 + $0x478] sm:$0xff]
  %v157 = vld [vmem:[%s0 + $0x480] sm:$0xff]
  %v158 = vld [vmem:[%s0 + $0x488] sm:$0xff]
  %v159 = vld [vmem:[%s0 + $0x490] sm:$0xff]
  %v160 = vld [vmem:[%s0 + $0x498] sm:$0xff]
  %v161 = vld [vmem:[%s0 + $0x4a0] sm:$0xff]
  %v162 = vld [vmem:[%s0 + $0x4a8] sm:$0xff]
  %v163 = vld [vmem:[%s0 + $0x4b0] sm:$0xff]
  %v164 = vld [vmem:[%s0 + $0x4b8] sm:$0xff]
  %v165 = vld [vmem:[%s0 + $0x4c0] sm:$0xff]
  %v166 = vld [vmem:[%s0 + $0x4c8] sm:$0xff]
  %v167 = vld [vmem:[%s0 + $0x4d0] sm:$0xff]
  %v168 = vld [vmem:[%s0 + $0x4d8] sm:$0xff]
  %v169 = vld [vmem:[%s0 + $0x4e0] sm:$0xff]
  %v170 = vld [vmem:[%s0 + $0x4e8] sm:$0xff]
  %v171 = vld [vmem:[%s0 + $0x4f0] sm:$0xff]
  %v172 = vld [vmem:[%s0 + $0x4f8] sm:$0xff]
  %v173 = vld [vmem:[%s0 + $0x500] sm:$0xff]
  %v174 = vld [vmem:[%s0 + $0x508] sm:$0xff]
  %v175 = vld [vmem:[%s0 + $0x510] sm:$0xff]
  %v176 = vld [vmem:[%s0 + $0x518] sm:$0xff]
  %v177 = vld [vmem:[%s0 + $0x520] sm:$0xff]
  %v178 = vld [vmem:[%s0 + $0x528] sm:$0xff]
  %v179 = vld [vmem:[%s0 + $0x530] sm:$0xff]
  %v180 = vld [vmem:[%s0 + $0x538] sm:$0xff]
  %v181 = vld [vmem:[%s0 + $0x540] sm:$0xff]
  %v182 = vld [vmem:[%s0 + $0x548] sm:$0xff]
  %v183 = vld [vmem:[%s0 + $0x550] sm:$0xff]
  %v184 = vld [vmem:[%s0 + $0x558] sm:$0xff]
  %v185 = vld [vmem:[%s0 + $0x560] sm:$0xff]
  %v186 = vld [vmem:[%s0 + $0x568] sm:$0xff]
  %v187 = vld [vmem:[%s0 + $0x570] sm:$0xff]
  %v188 = vld [vmem:[%s0 + $0x578] sm:$0xff]
  %v189 = vld [vmem:[%s0 + $0x580] sm:$0xff]
  %v190 = vld [vmem:[%s0 + $0x588] sm:$0xff]
  %v191 = vld [vmem:[%s0 + $0x590] sm:$0xff]
  %v192 = vld [vmem:[%s0 + $0x598] sm:$0xff]
  %v193 = vld [vmem:[%s0 + $0x5a0] sm:$0xff]
  %v194 = vld [vmem:[%s0 + $0x5a8] sm:$0xff]
  %v195 = vld [vmem:[%s0 + $0x5b0] sm:$0xff]
  %v196 = vld [vmem:[%s0 + $0x5b8] sm:$0xff]
  %v197 = vld [vmem:[%s0 + $0x5c0] sm:$0xff]
  %v198 = vld [vmem:[%s0 + $0x5c8] sm:$0xff]
  %v199 = vld [vmem:[%s0 + $0x5d0] sm:$0xff]
  %v200 = vld [vmem:[%s0 + $0x5d8] sm:$0xff]
  %v201 = vld [vmem:[%s0 + $0x5e0] sm:$0xff]
  %v202 = vld [vmem:[%s0 + $0x5e8] sm:$0xff]
  %v203 = vld [vmem:[%s0 + $0x5f0] sm:$0xff]
  %v204 = vld [vmem:[%s0 + $0x5f8] sm:$0xff]
  %v205 = vld [vmem:[%s0 + $0x600] sm:$0xff]
  %v206 = vld [vmem:[%s0 + $0x608] sm:$0xff]
  %v207 = vld [vmem:[%s0 + $0x610] sm:$0xff]
  %v208 = vld [vmem:[%s0 + $0x618] sm:$0xff]
  %v209 = vld [vmem:[%s0 + $0x620] sm:$0xff]
  %v210 = vld [vmem:[%s0 + $0x628] sm:$0xff]
  %v211 = vld [vmem:[%s0 + $0x630] sm:$0xff]
  %v212 = vld [vmem:[%s0 + $0x638] sm:$0xff]
  %v213 = vld [vmem:[%s0 + $0x640] sm:$0xff]
  %v214 = vld [vmem:[%s0 + $0x648] sm:$0xff]
  %v215 = vld [vmem:[%s0 + $0x650] sm:$0xff]
  %v216 = vld [vmem:[%s0 + $0x658] sm:$0xff]
  %v217 = vld [vmem:[%s0 + $0x660] sm:$0xff]
  %v218 = vld [vmem:[%s0 + $0x668] sm:$0xff]
  %v219 = vld [vmem:[%s0 + $0x670] sm:$0xff]
  %v220 = vld [vmem:[%s0 + $0x678] sm:$0xff]
  %v221 = vld [vmem:[%s0 + $0x680] sm:$0xff]
  %v222 = vld [vmem:[%s0 + $0x688] sm:$0xff]
  %v223 = vld [vmem:[%s0 + $0x690] sm:$0xff]
  %v224 = vld [vmem:[%s0 + $0x698] sm:$0xff]
  %v225 = vld [vmem:[%s0 + $0x6a0] sm:$0xff]
  %v226 = vld [vmem:[%s0 + $0x6a8] sm:$0xff]
  %v227 = vld [vmem:[%s0 + $0x6b0] sm:$0xff]
  %v228 = vld [vmem:[%s0 + $0x6b8] sm:$0xff]
  %v229 = vld [vmem:[%s0 + $0x6c0] sm:$0xff]
  %v230 = vld [vmem:[%s0 + $0x6c8] sm:$0xff]
  %v231 = vld [vmem:[%s0 + $0x6d0] sm:$0xff]
  %v232 = vld [vmem:[%s0 + $0x6d8] sm:$0xff]
  %v233 = vld [vmem:[%s0 + $0x6e0] sm:$0xff]
  %v234 = vld [vmem:[%s0 + $0x6e8] sm:$0xff]
  %v235 = vld [vmem:[%s0 + $0x6f0] sm:$0xff]
  %v236 = vld [vmem:[%s0 + $0x6f8] sm:$0xff]
  %v237 = vld [vmem:[%s0 + $0x700] sm:$0xff]
  %v238 = vld [vmem:[%s0 + $0x708] sm:$0xff]
  %v239 = vld [vmem:[%s0 + $0x710] sm:$0xff]
  %v240 = vld [vmem:[%s0 + $0x718] sm:$0xff]
  %v241 = vld [vmem:[%s0 + $0x720] sm:$0xff]
  %v242 = vld [vmem:[%s0 + $0x728] sm:$0xff]
  %v243 = vld [vmem:[%s0 + $0x730] sm:$0xff]
  %v244 = vld [vmem:[%s0 + $0x738] sm:$0xff]
  %v245 = vld [vmem:[%s0 + $0x740] sm:$0xff]
  %v246 = vld [vmem:[%s0 + $0x748] sm:$0xff]
  %v247 = vld [vmem:[%s0 + $0x750] sm:$0xff]
  %v248 = vld [vmem:[%s0 + $0x758] sm:$0xff]
  %v249 = vld [vmem:[%s0 + $0x760] sm:$0xff]
  %v250 = vld [vmem:[%s0 + $0x768] sm:$0xff]
  %v251 = vld [vmem:[%s0 + $0x770] sm:$0xff]
  %v252 = vld [vmem:[%s0 + $0x778] sm:$0xff]
  %v253 = vld [vmem:[%s0 + $0x780] sm:$0xff]
  %v254 = vld [vmem:[%s0 + $0x788] sm:$0xff]
  %v255 = vld [vmem:[%s0 + $0x790] sm:$0xff]
  %v256 = vld [vmem:[%s0 + $0x798] sm:$0xff]
  %v257 = vld [vmem:[%s0 + $0x7a0] sm:$0xff]
  %v258 = vld [vmem:[%s0 + $0x7a8] sm:$0xff]
  %v259 = vld [vmem:[%s0 + $0x7b0] sm:$0xff]
  %v260 = vld [vmem:[%s0 + $0x7b8] sm:$0xff]
  %v261 = vld [vmem:[%s0 + $0x7c0] sm:$0xff]
  %v262 = vld [vmem:[%s0 + $0x7c8] sm:$0xff]
  %v263 = vld [vmem:[%s0 + $0x7d0] sm:$0xff]
  %v264 = vld [vmem:[%s0 + $0x7d8] sm:$0xff]
  %v265 = vld [vmem:[%s0 + $0x7e0] sm:$0xff]
  %v266 = vld [vmem:[%s0 + $0x7e8] sm:$0xff]
  %v267 = vld [vmem:[%s0 + $0x7f0] sm:$0xff]
  %v268 = vld [vmem:[%s0 + $0x7f8] sm:$0xff]
  %269 = vmatpush.msra.mxu0 %v133
  %270 = vmatpush.msra.mxu0 %v125
  %271 = vmatpush.msra.mxu0 %v117
  %272 = vmatpush.msra.mxu0 %v109
  %273 = vmatpush.msra.mxu0 %v101
  %274 = vmatpush.msra.mxu0 %v93
  %275 = vmatpush.msra.mxu0 %v85
  %276 = vmatpush.msra.mxu0 %v77
  %277 = vmatpush.msra.mxu0 %v69
  %278 = vmatpush.msra.mxu0 %v61
  %279 = vmatpush.msra.mxu0 %v53
  %280 = vmatpush.msra.mxu0 %v45
  %281 = vmatpush.msra.mxu0 %v37
  %282 = vmatpush.msra.mxu0 %v29
  %283 = vmatpush.msra.mxu0 %v21
  %284 = vmatpush.msra.mxu0 %v13
  %285 = vmatmul.f32.gmra.mxu0 %v11
  %v286 = vpop.f32.mrf.mxu0
  %v287 = vadd.f32 0.0, %v286
  %288 = vdwg.mxu0
  %289 = vmatpush.msra.mxu0 %v261
  %290 = vmatpush.msra.mxu0 %v253
  %291 = vmatpush.msra.mxu0 %v245
  %292 = vmatpush.msra.mxu0 %v237
  %293 = vmatpush.msra.mxu0 %v229
  %294 = vmatpush.msra.mxu0 %v221
  %295 = vmatpush.msra.mxu0 %v213
  %296 = vmatpush.msra.mxu0 %v205
  %297 = vmatpush.msra.mxu0 %v197
  %298 = vmatpush.msra.mxu0 %v189
  %299 = vmatpush.msra.mxu0 %v181
  %300 = vmatpush.msra.mxu0 %v173
  %301 = vmatpush.msra.mxu0 %v165
  %302 = vmatpush.msra.mxu0 %v157
  %303 = vmatpush.msra.mxu0 %v149
  %304 = vmatpush.msra.mxu0 %v141
  %305 = vmatmul.f32.gmra.mxu0 %v12
  %v306 = vpop.f32.mrf.mxu0
  %v307 = vadd.f32 %v287, %v306
  %308 = vdwg.mxu0
  %309 = vmatpush.msra.mxu0 %v134
  %310 = vmatpush.msra.mxu0 %v126
  %311 = vmatpush.msra.mxu0 %v118
  %312 = vmatpush.msra.mxu0 %v110
  %313 = vmatpush.msra.mxu0 %v102
  %314 = vmatpush.msra.mxu0 %v94
  %315 = vmatpush.msra.mxu0 %v86
  %316 = vmatpush.msra.mxu0 %v78
  %317 = vmatpush.msra.mxu0 %v70
  %318 = vmatpush.msra.mxu0 %v62
  %319 = vmatpush.msra.mxu0 %v54
  %320 = vmatpush.msra.mxu0 %v46
  %321 = vmatpush.msra.mxu0 %v38
  %322 = vmatpush.msra.mxu0 %v30
  %323 = vmatpush.msra.mxu0 %v22
  %324 = vmatpush.msra.mxu0 %v14
  %325 = vmatmul.f32.gmra.mxu0 %v11
  %v326 = vpop.f32.mrf.mxu0
  %v327 = vadd.f32 0.0, %v326
  %328 = vdwg.mxu0
  %329 = vmatpush.msra.mxu0 %v262
  %330 = vmatpush.msra.mxu0 %v254
  %331 = vmatpush.msra.mxu0 %v246
  %332 = vmatpush.msra.mxu0 %v238
  %333 = vmatpush.msra.mxu0 %v230
  %334 = vmatpush.msra.mxu0 %v222
  %335 = vmatpush.msra.mxu0 %v214
  %336 = vmatpush.msra.mxu0 %v206
  %337 = vmatpush.msra.mxu0 %v198
  %338 = vmatpush.msra.mxu0 %v190
  %339 = vmatpush.msra.mxu0 %v182
  %340 = vmatpush.msra.mxu0 %v174
  %341 = vmatpush.msra.mxu0 %v166
  %342 = vmatpush.msra.mxu0 %v158
  %343 = vmatpush.msra.mxu0 %v150
  %344 = vmatpush.msra.mxu0 %v142
  %345 = vmatmul.f32.gmra.mxu0 %v12
  %v346 = vpop.f32.mrf.mxu0
  %v347 = vadd.f32 %v327, %v346
  %348 = vdwg.mxu0
  %349 = vmatpush.msra.mxu0 %v135
  %350 = vmatpush.msra.mxu0 %v127
  %351 = vmatpush.msra.mxu0 %v119
  %352 = vmatpush.msra.mxu0 %v111
  %353 = vmatpush.msra.mxu0 %v103
  %354 = vmatpush.msra.mxu0 %v95
  %355 = vmatpush.msra.mxu0 %v87
  %356 = vmatpush.msra.mxu0 %v79
  %357 = vmatpush.msra.mxu0 %v71
  %358 = vmatpush.msra.mxu0 %v63
  %359 = vmatpush.msra.mxu0 %v55
  %360 = vmatpush.msra.mxu0 %v47
  %361 = vmatpush.msra.mxu0 %v39
  %362 = vmatpush.msra.mxu0 %v31
  %363 = vmatpush.msra.mxu0 %v23
  %364 = vmatpush.msra.mxu0 %v15
  %365 = vmatmul.f32.gmra.mxu0 %v11
  %v366 = vpop.f32.mrf.mxu0
  %v367 = vadd.f32 0.0, %v366
  %368 = vdwg.mxu0
  %369 = vmatpush.msra.mxu0 %v263
  %370 = vmatpush.msra.mxu0 %v255
  %371 = vmatpush.msra.mxu0 %v247
  %372 = vmatpush.msra.mxu0 %v239
  %373 = vmatpush.msra.mxu0 %v231
  %374 = vmatpush.msra.mxu0 %v223
  %375 = vmatpush.msra.mxu0 %v215
  %376 = vmatpush.msra.mxu0 %v207
  %377 = vmatpush.msra.mxu0 %v199
  %378 = vmatpush.msra.mxu0 %v191
  %379 = vmatpush.msra.mxu0 %v183
  %380 = vmatpush.msra.mxu0 %v175
  %381 = vmatpush.msra.mxu0 %v167
  %382 = vmatpush.msra.mxu0 %v159
  %383 = vmatpush.msra.mxu0 %v151
  %384 = vmatpush.msra.mxu0 %v143
  %385 = vmatmul.f32.gmra.mxu0 %v12
  %v386 = vpop.f32.mrf.mxu0
  %v387 = vadd.f32 %v367, %v386
  %388 = vdwg.mxu0
  %389 = vmatpush.msra.mxu0 %v136
  %390 = vmatpush.msra.mxu0 %v128
  %391 = vmatpush.msra.mxu0 %v120
  %392 = vmatpush.msra.mxu0 %v112
  %393 = vmatpush.msra.mxu0 %v104
  %394 = vmatpush.msra.mxu0 %v96
  %395 = vmatpush.msra.mxu0 %v88
  %396 = vmatpush.msra.mxu0 %v80
  %397 = vmatpush.msra.mxu0 %v72
  %398 = vmatpush.msra.mxu0 %v64
  %399 = vmatpush.msra.mxu0 %v56
  %400 = vmatpush.msra.mxu0 %v48
  %401 = vmatpush.msra.mxu0 %v40
  %402 = vmatpush.msra.mxu0 %v32
  %403 = vmatpush.msra.mxu0 %v24
  %404 = vmatpush.msra.mxu0 %v16
  %405 = vmatmul.f32.gmra.mxu0 %v11
  %v406 = vpop.f32.mrf.mxu0
  %v407 = vadd.f32 0.0, %v406
  %408 = vdwg.mxu0
  %409 = vmatpush.msra.mxu0 %v264
  %410 = vmatpush.msra.mxu0 %v256
  %411 = vmatpush.msra.mxu0 %v248
  %412 = vmatpush.msra.mxu0 %v240
  %413 = vmatpush.msra.mxu0 %v232
  %414 = vmatpush.msra.mxu0 %v224
  %415 = vmatpush.msra.mxu0 %v216
  %416 = vmatpush.msra.mxu0 %v208
  %417 = vmatpush.msra.mxu0 %v200
  %418 = vmatpush.msra.mxu0 %v192
  %419 = vmatpush.msra.mxu0 %v184
  %420 = vmatpush.msra.mxu0 %v176
  %421 = vmatpush.msra.mxu0 %v168
  %422 = vmatpush.msra.mxu0 %v160
  %423 = vmatpush.msra.mxu0 %v152
  %424 = vmatpush.msra.mxu0 %v144
  %425 = vmatmul.f32.gmra.mxu0 %v12
  %v426 = vpop.f32.mrf.mxu0
  %v427 = vadd.f32 %v407, %v426
  %428 = vdwg.mxu0
  %429 = vmatpush.msra.mxu0 %v137
  %430 = vmatpush.msra.mxu0 %v129
  %431 = vmatpush.msra.mxu0 %v121
  %432 = vmatpush.msra.mxu0 %v113
  %433 = vmatpush.msra.mxu0 %v105
  %434 = vmatpush.msra.mxu0 %v97
  %435 = vmatpush.msra.mxu0 %v89
  %436 = vmatpush.msra.mxu0 %v81
  %437 = vmatpush.msra.mxu0 %v73
  %438 = vmatpush.msra.mxu0 %v65
  %439 = vmatpush.msra.mxu0 %v57
  %440 = vmatpush.msra.mxu0 %v49
  %441 = vmatpush.msra.mxu0 %v41
  %442 = vmatpush.msra.mxu0 %v33
  %443 = vmatpush.msra.mxu0 %v25
  %444 = vmatpush.msra.mxu0 %v17
  %445 = vmatmul.f32.gmra.mxu0 %v11
  %v446 = vpop.f32.mrf.mxu0
  %v447 = vadd.f32 0.0, %v446
  %448 = vdwg.mxu0
  %449 = vmatpush.msra.mxu0 %v265
  %450 = vmatpush.msra.mxu0 %v257
  %451 = vmatpush.msra.mxu0 %v249
  %452 = vmatpush.msra.mxu0 %v241
  %453 = vmatpush.msra.mxu0 %v233
  %454 = vmatpush.msra.mxu0 %v225
  %455 = vmatpush.msra.mxu0 %v217
  %456 = vmatpush.msra.mxu0 %v209
  %457 = vmatpush.msra.mxu0 %v201
  %458 = vmatpush.msra.mxu0 %v193
  %459 = vmatpush.msra.mxu0 %v185
  %460 = vmatpush.msra.mxu0 %v177
  %461 = vmatpush.msra.mxu0 %v169
  %462 = vmatpush.msra.mxu0 %v161
  %463 = vmatpush.msra.mxu0 %v153
  %464 = vmatpush.msra.mxu0 %v145
  %465 = vmatmul.f32.gmra.mxu0 %v12
  %v466 = vpop.f32.mrf.mxu0
  %v467 = vadd.f32 %v447, %v466
  %468 = vdwg.mxu0
  %469 = vmatpush.msra.mxu0 %v138
  %470 = vmatpush.msra.mxu0 %v130
  %471 = vmatpush.msra.mxu0 %v122
  %472 = vmatpush.msra.mxu0 %v114
  %473 = vmatpush.msra.mxu0 %v106
  %474 = vmatpush.msra.mxu0 %v98
  %475 = vmatpush.msra.mxu0 %v90
  %476 = vmatpush.msra.mxu0 %v82
  %477 = vmatpush.msra.mxu0 %v74
  %478 = vmatpush.msra.mxu0 %v66
  %479 = vmatpush.msra.mxu0 %v58
  %480 = vmatpush.msra.mxu0 %v50
  %481 = vmatpush.msra.mxu0 %v42
  %482 = vmatpush.msra.mxu0 %v34
  %483 = vmatpush.msra.mxu0 %v26
  %484 = vmatpush.msra.mxu0 %v18
  %485 = vmatmul.f32.gmra.mxu0 %v11
  %v486 = vpop.f32.mrf.mxu0
  %v487 = vadd.f32 0.0, %v486
  %488 = vdwg.mxu0
  %489 = vmatpush.msra.mxu0 %v266
  %490 = vmatpush.msra.mxu0 %v258
  %491 = vmatpush.msra.mxu0 %v250
  %492 = vmatpush.msra.mxu0 %v242
  %493 = vmatpush.msra.mxu0 %v234
  %494 = vmatpush.msra.mxu0 %v226
  %495 = vmatpush.msra.mxu0 %v218
  %496 = vmatpush.msra.mxu0 %v210
  %497 = vmatpush.msra.mxu0 %v202
  %498 = vmatpush.msra.mxu0 %v194
  %499 = vmatpush.msra.mxu0 %v186
  %500 = vmatpush.msra.mxu0 %v178
  %501 = vmatpush.msra.mxu0 %v170
  %502 = vmatpush.msra.mxu0 %v162
  %503 = vmatpush.msra.mxu0 %v154
  %504 = vmatpush.msra.mxu0 %v146
  %505 = vmatmul.f32.gmra.mxu0 %v12
  %v506 = vpop.f32.mrf.mxu0
  %v507 = vadd.f32 %v487, %v506
  %508 = vdwg.mxu0
  %509 = vmatpush.msra.mxu0 %v139
  %510 = vmatpush.msra.mxu0 %v131
  %511 = vmatpush.msra.mxu0 %v123
  %512 = vmatpush.msra.mxu0 %v115
  %513 = vmatpush.msra.mxu0 %v107
  %514 = vmatpush.msra.mxu0 %v99
  %515 = vmatpush.msra.mxu0 %v91
  %516 = vmatpush.msra.mxu0 %v83
  %517 = vmatpush.msra.mxu0 %v75
  %518 = vmatpush.msra.mxu0 %v67
  %519 = vmatpush.msra.mxu0 %v59
  %520 = vmatpush.msra.mxu0 %v51
  %521 = vmatpush.msra.mxu0 %v43
  %522 = vmatpush.msra.mxu0 %v35
  %523 = vmatpush.msra.mxu0 %v27
  %524 = vmatpush.msra.mxu0 %v19
  %525 = vmatmul.f32.gmra.mxu0 %v11
  %v526 = vpop.f32.mrf.mxu0
  %v527 = vadd.f32 0.0, %v526
  %528 = vdwg.mxu0
  %529 = vmatpush.msra.mxu0 %v267
  %530 = vmatpush.msra.mxu0 %v259
  %531 = vmatpush.msra.mxu0 %v251
  %532 = vmatpush.msra.mxu0 %v243
  %533 = vmatpush.msra.mxu0 %v235
  %534 = vmatpush.msra.mxu0 %v227
  %535 = vmatpush.msra.mxu0 %v219
  %536 = vmatpush.msra.mxu0 %v211
  %537 = vmatpush.msra.mxu0 %v203
  %538 = vmatpush.msra.mxu0 %v195
  %539 = vmatpush.msra.mxu0 %v187
  %540 = vmatpush.msra.mxu0 %v179
  %541 = vmatpush.msra.mxu0 %v171
  %542 = vmatpush.msra.mxu0 %v163
  %543 = vmatpush.msra.mxu0 %v155
  %544 = vmatpush.msra.mxu0 %v147
  %545 = vmatmul.f32.gmra.mxu0 %v12
  %v546 = vpop.f32.mrf.mxu0
  %v547 = vadd.f32 %v527, %v546
  %548 = vdwg.mxu0
  %549 = vmatpush.msra.mxu0 %v140
  %550 = vmatpush.msra.mxu0 %v132
  %551 = vmatpush.msra.mxu0 %v124
  %552 = vmatpush.msra.mxu0 %v116
  %553 = vmatpush.msra.mxu0 %v108
  %554 = vmatpush.msra.mxu0 %v100
  %555 = vmatpush.msra.mxu0 %v92
  %556 = vmatpush.msra.mxu0 %v84
  %557 = vmatpush.msra.mxu0 %v76
  %558 = vmatpush.msra.mxu0 %v68
  %559 = vmatpush.msra.mxu0 %v60
  %560 = vmatpush.msra.mxu0 %v52
  %561 = vmatpush.msra.mxu0 %v44
  %562 = vmatpush.msra.mxu0 %v36
  %563 = vmatpush.msra.mxu0 %v28
  %564 = vmatpush.msra.mxu0 %v20
  %565 = vmatmul.f32.gmra.mxu0 %v11
  %v566 = vpop.f32.mrf.mxu0
  %v567 = vadd.f32 0.0, %v566
  %568 = vdwg.mxu0
  %569 = vmatpush.msra.mxu0 %v268
  %570 = vmatpush.msra.mxu0 %v260
  %571 = vmatpush.msra.mxu0 %v252
  %572 = vmatpush.msra.mxu0 %v244
  %573 = vmatpush.msra.mxu0 %v236
  %574 = vmatpush.msra.mxu0 %v228
  %575 = vmatpush.msra.mxu0 %v220
  %576 = vmatpush.msra.mxu0 %v212
  %577 = vmatpush.msra.mxu0 %v204
  %578 = vmatpush.msra.mxu0 %v196
  %579 = vmatpush.msra.mxu0 %v188
  %580 = vmatpush.msra.mxu0 %v180
  %581 = vmatpush.msra.mxu0 %v172
  %582 = vmatpush.msra.mxu0 %v164
  %583 = vmatpush.msra.mxu0 %v156
  %584 = vmatpush.msra.mxu0 %v148
  %585 = vmatmul.f32.gmra.mxu0 %v12
  %v586 = vpop.f32.mrf.mxu0
  %v587 = vadd.f32 %v567, %v586
  %588 = vdwg.mxu0
  %589 = vst [vmem:[%s2] sm:$0xff] %v307
  %590 = vst [vmem:[%s2 + $0x8] sm:$0xff] %v347
  %591 = vst [vmem:[%s2 + $0x10] sm:$0xff] %v387
  %592 = vst [vmem:[%s2 + $0x18] sm:$0xff] %v427
  %593 = vst [vmem:[%s2 + $0x20] sm:$0xff] %v467
  %594 = vst [vmem:[%s2 + $0x28] sm:$0xff] %v507
  %595 = vst [vmem:[%s2 + $0x30] sm:$0xff] %v547
  %596 = vst [vmem:[%s2 + $0x38] sm:$0xff] %v587
  // Predicated region
  $region10: #{interpolate_bilinear_align_corners.1} parent=0 // pred_check
    _
  $region11: #{interpolate_bilinear_align_corners.1} parent=0 // pred_check_branch
    %598 = sbr.rel (0) target = $region13
  $region12: #{interpolate_bilinear_align_corners.1} parent=0 // pred_region
    _
  $region13: #{interpolate_bilinear_align_corners.1} parent=0 // pred_fallthru
    _
  // Predicated region
  $region14: #{interpolate_bilinear_align_corners.1} parent=0 // pred_check
    _
  $region15: #{interpolate_bilinear_align_corners.1} parent=0 // pred_check_branch
    %600 = sbr.rel (0) target = $region17
  $region16: #{interpolate_bilinear_align_corners.1} parent=0 // pred_region
    _
  $region17: #{interpolate_bilinear_align_corners.1} parent=0 // pred_fallthru
    _

</llo_original>
